<compile_context>
chip_gen: v5e
topology: v5e:2x2
jax: 0.10.0
libtpu: 0.0.40
codegen_flags: <defaults>
</compile_context>

<pallas_src>
import jax
import jax.numpy as jnp
from jax import lax
from jax.experimental import pallas as pl
from jax.experimental.pallas import tpu as pltpu


_NEG_FILL = -1e30  # finite "minus infinity": exp(fill - row_max) underflows to 0


def _round_up(x, m):
    return ((x + m - 1) // m) * m


def _make_kernel(tm, tn, n_valid, m_valid, mask_cols):
    """Kernel body for static tile sizes (tm, tn) and logits shape (N, M)."""

    def kernel(img_ref, txt_ref, out_ref,
               m_img, l_img, d_img, m_txt, l_txt, d_txt):
        r = pl.program_id(0)            # row-tile index    ("parallel")
        c = pl.program_id(1)            # column-tile index ("arbitrary" reduction)
        n_col_tiles = pl.num_programs(1)
        row0 = r * tm
        col0 = c * tn

        # ---- init running stats at the first column tile ---------------------
        @pl.when(c == 0)
        def _init():
            neg_inf = jnp.full((tm, 1), -jnp.inf, jnp.float32)
            zeros = jnp.zeros((tm, 1), jnp.float32)
            m_img[...] = neg_inf
            m_txt[...] = neg_inf
            l_img[...] = zeros
            l_txt[...] = zeros
            d_img[...] = zeros
            d_txt[...] = zeros

        img = img_ref[...].astype(jnp.float32)
        txt = txt_ref[...].astype(jnp.float32)

        # ---- in-kernel column masking for the ragged last column tile --------
        # Only emitted (trace time) when M is not a multiple of TN; a single
        # (1, TN) iota broadcast keeps the extra VPU work minimal.  Garbage
        # lanes become a large-negative *finite* value, so max/exp stay NaN-free.
        if mask_cols:
            col_ids = col0 + lax.broadcasted_iota(jnp.int32, (1, tn), 1)
            col_ok = col_ids < m_valid
            img = jnp.where(col_ok, img, _NEG_FILL)
            txt = jnp.where(col_ok, txt, _NEG_FILL)

        # ---- online logsumexp update (all stats kept (TM, 1) f32) ------------
        def online_update(tile, m_ref, l_ref):
            m_prev = m_ref[...]
            m_new = jnp.maximum(m_prev, jnp.max(tile, axis=-1, keepdims=True))
            alpha = jnp.exp(m_prev - m_new)
            p = jnp.exp(tile - m_new)
            l_ref[...] = alpha * l_ref[...] + jnp.sum(p, axis=-1, keepdims=True)
            m_ref[...] = m_new

        online_update(img, m_img, l_img)
        online_update(txt, m_txt, l_txt)

        # ---- diagonal pick: only in tiles intersecting the diagonal band -----
        tile_has_diag = jnp.logical_and(row0 < col0 + tn, col0 < row0 + tm)

        @pl.when(tile_has_diag)
        def _pick_diag():
            # mask[i, j] = (row0 + i == col0 + j)  <=>  (j - i == row0 - col0)
            j_minus_i = (lax.broadcasted_iota(jnp.int32, (tm, tn), 1)
                         - lax.broadcasted_iota(jnp.int32, (tm, tn), 0))
            mask = j_minus_i == (row0 - col0)
            d_img[...] += jnp.sum(jnp.where(mask, img, 0.0),
                                  axis=-1, keepdims=True)
            d_txt[...] += jnp.sum(jnp.where(mask, txt, 0.0),
                                  axis=-1, keepdims=True)

        # ---- finalize at the last column tile ---------------------------------
        @pl.when(c == n_col_tiles - 1)
        def _finalize():
            lse_img = m_img[...] + jnp.log(l_img[...])
            lse_txt = m_txt[...] + jnp.log(l_txt[...])
            per_row = (lse_img - d_img[...]) + (lse_txt - d_txt[...])  # (TM, 1)
            row_ids = row0 + lax.broadcasted_iota(jnp.int32, (tm, 1), 0)
            # Rows >= N are never written back (partial block), but zero them
            # anyway so any garbage/NaN never reaches the store path.
            out_ref[...] = jnp.where(row_ids < n_valid, per_row, 0.0)

    return kernel


def clip_loss(logits_per_image, logits_per_text, *, tm=256, tn=2048):
    """Pallas TPU implementation of ClipLoss.forward (world_size=1 defaults)."""
    assert logits_per_image.shape == logits_per_text.shape
    n, m = logits_per_image.shape
    assert n <= m, "labels = arange(N) requires N <= number of classes (columns)"

    isz_i = jnp.dtype(logits_per_image.dtype).itemsize
    isz_t = jnp.dtype(logits_per_text.dtype).itemsize
    # Minimum sublane tile per dtype: 8 rows for 4-byte, 16 for 2-byte, 32 for
    # 1-byte types (conservative max over both inputs).
    sub = max(8, 8 * (4 // isz_i), 8 * (4 // isz_t))

    # Clamp tile sizes for small inputs while keeping (sub, 128) alignment.
    tm = _round_up(min(tm, _round_up(n, sub)), sub)
    tn = _round_up(min(tn, _round_up(m, 128)), 128)

    grid = (pl.cdiv(n, tm), pl.cdiv(m, tn))
    mask_cols = (m % tn) != 0

    # VMEM budget: 2 inputs x 2 buffers x (tm, tn) tiles + output/scratch slack.
    vmem_need = 2 * tm * tn * (isz_i + isz_t) + 10 * tm * 128 * 4
    vmem_limit = max(32 * 1024 * 1024, vmem_need + (8 << 20))

    cost = pl.CostEstimate(
        flops=12 * n * m,
        transcendentals=2 * n * m + 4 * n,
        bytes_accessed=n * m * (isz_i + isz_t) + n * 4,
    )

    partial_rows = pl.pallas_call(
        _make_kernel(tm, tn, n, m, mask_cols),
        out_shape=jax.ShapeDtypeStruct((n, 1), jnp.float32),
        grid_spec=pltpu.PrefetchScalarGridSpec(
            num_scalar_prefetch=0,
            grid=grid,
            in_specs=[
                pl.BlockSpec((tm, tn), lambda r, c: (r, c)),
                pl.BlockSpec((tm, tn), lambda r, c: (r, c)),
            ],
            out_specs=pl.BlockSpec((tm, 1), lambda r, c: (r, 0)),
            scratch_shapes=[pltpu.VMEM((tm, 1), jnp.float32) for _ in range(6)],
        ),
        compiler_params=pltpu.CompilerParams(
            dimension_semantics=("parallel", "arbitrary"),
            vmem_limit_bytes=int(vmem_limit),
        ),
        cost_estimate=cost,
    )(logits_per_image, logits_per_text)

    # CE mean + /2 for the two symmetric losses.
    return jnp.sum(partial_rows) / (2.0 * n)


def _reference_clip_loss(logits_per_image, logits_per_text):
    # Pure-JAX reference (matches F.cross_entropy with labels = arange(N)).
    def ce(logits):
        n = logits.shape[0]
        logp = jax.nn.log_softmax(logits.astype(jnp.float32), axis=-1)
        return -jnp.mean(logp[jnp.arange(n), jnp.arange(n)])

    return (ce(logits_per_image) + ce(logits_per_text)) * 0.5


if __name__ == "__main__":
    key = jax.random.PRNGKey(0)
    k_img, k_txt, k_big, k_bf = jax.random.split(key, 4)

    # --- Small CLIP-like setup: batch=8, embedding dim=32 --------------------
    batch, dim = 8, 32
    img_feat = jax.random.normal(k_img, (batch, dim), dtype=jnp.float32)
    txt_feat = jax.random.normal(k_txt, (batch, dim), dtype=jnp.float32)
    img_feat = img_feat / jnp.linalg.norm(img_feat, axis=-1, keepdims=True)
    txt_feat = txt_feat / jnp.linalg.norm(txt_feat, axis=-1, keepdims=True)

    logit_scale = jnp.float32(100.0)  # deterministic "learned" temperature
    logits_per_image = logit_scale * img_feat @ txt_feat.T  # (N, N)
    logits_per_text = logits_per_image.T                    # (N, N)

    loss = jax.block_until_ready(clip_loss(logits_per_image, logits_per_text))
    ref = _reference_clip_loss(logits_per_image, logits_per_text)
    assert jnp.allclose(loss, ref, rtol=1e-5, atol=1e-5), (loss, ref)

    # --- Multi-tile check: ragged rows AND columns (300 % 128, 300 % 256),
    # online logsumexp across 2 column tiles, 3-way parallel row axis ---------
    n_big = 300
    big = jax.random.normal(k_big, (n_big, n_big), dtype=jnp.float32) * 5.0
    loss_big = jax.block_until_ready(clip_loss(big, big.T, tm=128, tn=256))
    ref_big = _reference_clip_loss(big, big.T)
    assert jnp.allclose(loss_big, ref_big, rtol=1e-5, atol=1e-5), (loss_big, ref_big)

    # --- bf16 path: native bf16 across the pallas_call boundary, (16,128)
    # sublane rounding, partial block on both axes ----------------------------
    n_bf = 200
    bf = (jax.random.normal(k_bf, (n_bf, n_bf), dtype=jnp.float32) * 3.0
          ).astype(jnp.bfloat16)
    loss_bf = jax.block_until_ready(clip_loss(bf, bf.T))
    ref_bf = _reference_clip_loss(bf, bf.T)
    assert jnp.allclose(loss_bf, ref_bf, rtol=1e-4, atol=1e-4), (loss_bf, ref_bf)

    print("KERNEL_OK")
</pallas_src>

<mosaic_0001>
module attributes {stable_mosaic.version = 11 : i64} {
  func.func @kernel(%arg0: i32, %arg1: i32, %arg2: memref<8x128xf32, #tpu.memory_space<vmem>>, %arg3: memref<8x128xf32, #tpu.memory_space<vmem>>, %arg4: memref<8x1xf32, #tpu.memory_space<vmem>>, %arg5: memref<8x1xf32, #tpu.memory_space<vmem>>, %arg6: memref<8x1xf32, #tpu.memory_space<vmem>>, %arg7: memref<8x1xf32, #tpu.memory_space<vmem>>, %arg8: memref<8x1xf32, #tpu.memory_space<vmem>>, %arg9: memref<8x1xf32, #tpu.memory_space<vmem>>, %arg10: memref<8x1xf32, #tpu.memory_space<vmem>>) attributes {dimension_semantics = [#tpu.dimension_semantics<parallel>, #tpu.dimension_semantics<arbitrary>], iteration_bounds = array<i64: 1, 1>, scalar_prefetch = 0 : i64, scratch_operands = 6 : i64, tpu.core_type = #tpu.core_type<tc>, window_params = [{transform_indices = @transform_0, window_bounds = array<i64: 8, 128>}, {transform_indices = @transform_1, window_bounds = array<i64: 8, 128>}, {transform_indices = @transform_2, window_bounds = array<i64: 8, 1>}]} {
    %c8_i32 = arith.constant 8 : i32
    %0 = arith.muli %arg0, %c8_i32 : i32
    %c128_i32 = arith.constant 128 : i32
    %1 = arith.muli %arg1, %c128_i32 : i32
    %c0_i32 = arith.constant 0 : i32
    %2 = arith.cmpi eq, %arg1, %c0_i32 : i32
    %3 = arith.extui %2 : i1 to i32
    %c0_i32_0 = arith.constant 0 : i32
    %4 = arith.cmpi ne, %3, %c0_i32_0 : i32
    scf.if %4 {
      %cst_31 = arith.constant 0xFF800000 : f32
      %62 = vector.broadcast %cst_31 : f32 to vector<8x1xf32>
      %cst_32 = arith.constant 0.000000e+00 : f32
      %63 = vector.broadcast %cst_32 : f32 to vector<8x1xf32>
      %c0_33 = arith.constant 0 : index
      %c0_34 = arith.constant 0 : index
      %64 = vector.load %arg5[%c0_33, %c0_34] : memref<8x1xf32, #tpu.memory_space<vmem>>, vector<8x1xf32>
      tpu.vector_store %arg5[%c0_33, %c0_34], %62 {strides = array<i32>} : memref<8x1xf32, #tpu.memory_space<vmem>>, vector<8x1xf32>,
      %c0_35 = arith.constant 0 : index
      %c0_36 = arith.constant 0 : index
      %65 = vector.load %arg8[%c0_35, %c0_36] : memref<8x1xf32, #tpu.memory_space<vmem>>, vector<8x1xf32>
      tpu.vector_store %arg8[%c0_35, %c0_36], %62 {strides = array<i32>} : memref<8x1xf32, #tpu.memory_space<vmem>>, vector<8x1xf32>,
      %c0_37 = arith.constant 0 : index
      %c0_38 = arith.constant 0 : index
      %66 = vector.load %arg6[%c0_37, %c0_38] : memref<8x1xf32, #tpu.memory_space<vmem>>, vector<8x1xf32>
      tpu.vector_store %arg6[%c0_37, %c0_38], %63 {strides = array<i32>} : memref<8x1xf32, #tpu.memory_space<vmem>>, vector<8x1xf32>,
      %c0_39 = arith.constant 0 : index
      %c0_40 = arith.constant 0 : index
      %67 = vector.load %arg9[%c0_39, %c0_40] : memref<8x1xf32, #tpu.memory_space<vmem>>, vector<8x1xf32>
      tpu.vector_store %arg9[%c0_39, %c0_40], %63 {strides = array<i32>} : memref<8x1xf32, #tpu.memory_space<vmem>>, vector<8x1xf32>,
      %c0_41 = arith.constant 0 : index
      %c0_42 = arith.constant 0 : index
      %68 = vector.load %arg7[%c0_41, %c0_42] : memref<8x1xf32, #tpu.memory_space<vmem>>, vector<8x1xf32>
      tpu.vector_store %arg7[%c0_41, %c0_42], %63 {strides = array<i32>} : memref<8x1xf32, #tpu.memory_space<vmem>>, vector<8x1xf32>,
      %c0_43 = arith.constant 0 : index
      %c0_44 = arith.constant 0 : index
      %69 = vector.load %arg10[%c0_43, %c0_44] : memref<8x1xf32, #tpu.memory_space<vmem>>, vector<8x1xf32>
      tpu.vector_store %arg10[%c0_43, %c0_44], %63 {strides = array<i32>} : memref<8x1xf32, #tpu.memory_space<vmem>>, vector<8x1xf32>,
    } else {
    }
    %c0 = arith.constant 0 : index
    %c0_1 = arith.constant 0 : index
    %5 = vector.load %arg2[%c0, %c0_1] : memref<8x128xf32, #tpu.memory_space<vmem>>, vector<8x128xf32>
    %c0_2 = arith.constant 0 : index
    %c0_3 = arith.constant 0 : index
    %6 = vector.load %arg3[%c0_2, %c0_3] : memref<8x128xf32, #tpu.memory_space<vmem>>, vector<8x128xf32>
    %7 = tpu.iota {dimensions = array<i32: 1>} : vector<1x128xi32>
    %8 = vector.broadcast %1 : i32 to vector<1x128xi32>
    %9 = arith.addi %8, %7 : vector<1x128xi32>
    %c8_i32_4 = arith.constant 8 : i32
    %10 = vector.broadcast %c8_i32_4 : i32 to vector<1x128xi32>
    %11 = arith.cmpi slt, %9, %10 : vector<1x128xi32>
    %cst = arith.constant -1.000000e+30 : f32
    %12 = vector.shape_cast %11 : vector<1x128xi1> to vector<1x128xi1>
    %13 = vector.broadcast %12 : vector<1x128xi1> to vector<8x128xi1>
    %14 = vector.broadcast %cst : f32 to vector<8x128xf32>
    %15 = arith.select %13, %5, %14 : vector<8x128xi1>, vector<8x128xf32>
    %cst_5 = arith.constant -1.000000e+30 : f32
    %16 = vector.shape_cast %11 : vector<1x128xi1> to vector<1x128xi1>
    %17 = vector.broadcast %16 : vector<1x128xi1> to vector<8x128xi1>
    %18 = vector.broadcast %cst_5 : f32 to vector<8x128xf32>
    %19 = arith.select %17, %6, %18 : vector<8x128xi1>, vector<8x128xf32>
    %c0_6 = arith.constant 0 : index
    %c0_7 = arith.constant 0 : index
    %20 = vector.load %arg5[%c0_6, %c0_7] : memref<8x1xf32, #tpu.memory_space<vmem>>, vector<8x1xf32>
    %cst_8 = arith.constant dense<0xFF800000> : vector<8xf32>
    %21 = vector.multi_reduction <maximumf>, %15, %cst_8 [1] : vector<8x128xf32> to vector<8xf32>
    %22 = vector.shape_cast %21 : vector<8xf32> to vector<8x1xf32>
    %23 = arith.maximumf %20, %22 : vector<8x1xf32>
    %24 = arith.subf %20, %23 : vector<8x1xf32>
    %25 = math.exp %24 : vector<8x1xf32>
    %26 = vector.broadcast %23 : vector<8x1xf32> to vector<8x128xf32>
    %27 = arith.subf %15, %26 : vector<8x128xf32>
    %28 = math.exp %27 : vector<8x128xf32>
    %c0_9 = arith.constant 0 : index
    %c0_10 = arith.constant 0 : index
    %29 = vector.load %arg6[%c0_9, %c0_10] : memref<8x1xf32, #tpu.memory_space<vmem>>, vector<8x1xf32>
    %30 = arith.mulf %25, %29 : vector<8x1xf32>
    %cst_11 = arith.constant dense<0.000000e+00> : vector<8xf32>
    %31 = vector.multi_reduction <add>, %28, %cst_11 [1] : vector<8x128xf32> to vector<8xf32>
    %32 = vector.shape_cast %31 : vector<8xf32> to vector<8x1xf32>
    %33 = arith.addf %30, %32 : vector<8x1xf32>
    %c0_12 = arith.constant 0 : index
    %c0_13 = arith.constant 0 : index
    %34 = vector.load %arg6[%c0_12, %c0_13] : memref<8x1xf32, #tpu.memory_space<vmem>>, vector<8x1xf32>
    tpu.vector_store %arg6[%c0_12, %c0_13], %33 {strides = array<i32>} : memref<8x1xf32, #tpu.memory_space<vmem>>, vector<8x1xf32>,
    %c0_14 = arith.constant 0 : index
    %c0_15 = arith.constant 0 : index
    %35 = vector.load %arg5[%c0_14, %c0_15] : memref<8x1xf32, #tpu.memory_space<vmem>>, vector<8x1xf32>
    tpu.vector_store %arg5[%c0_14, %c0_15], %23 {strides = array<i32>} : memref<8x1xf32, #tpu.memory_space<vmem>>, vector<8x1xf32>,
    %c0_16 = arith.constant 0 : index
    %c0_17 = arith.constant 0 : index
    %36 = vector.load %arg8[%c0_16, %c0_17] : memref<8x1xf32, #tpu.memory_space<vmem>>, vector<8x1xf32>
    %cst_18 = arith.constant dense<0xFF800000> : vector<8xf32>
    %37 = vector.multi_reduction <maximumf>, %19, %cst_18 [1] : vector<8x128xf32> to vector<8xf32>
    %38 = vector.shape_cast %37 : vector<8xf32> to vector<8x1xf32>
    %39 = arith.maximumf %36, %38 : vector<8x1xf32>
    %40 = arith.subf %36, %39 : vector<8x1xf32>
    %41 = math.exp %40 : vector<8x1xf32>
    %42 = vector.broadcast %39 : vector<8x1xf32> to vector<8x128xf32>
    %43 = arith.subf %19, %42 : vector<8x128xf32>
    %44 = math.exp %43 : vector<8x128xf32>
    %c0_19 = arith.constant 0 : index
    %c0_20 = arith.constant 0 : index
    %45 = vector.load %arg9[%c0_19, %c0_20] : memref<8x1xf32, #tpu.memory_space<vmem>>, vector<8x1xf32>
    %46 = arith.mulf %41, %45 : vector<8x1xf32>
    %cst_21 = arith.constant dense<0.000000e+00> : vector<8xf32>
    %47 = vector.multi_reduction <add>, %44, %cst_21 [1] : vector<8x128xf32> to vector<8xf32>
    %48 = vector.shape_cast %47 : vector<8xf32> to vector<8x1xf32>
    %49 = arith.addf %46, %48 : vector<8x1xf32>
    %c0_22 = arith.constant 0 : index
    %c0_23 = arith.constant 0 : index
    %50 = vector.load %arg9[%c0_22, %c0_23] : memref<8x1xf32, #tpu.memory_space<vmem>>, vector<8x1xf32>
    tpu.vector_store %arg9[%c0_22, %c0_23], %49 {strides = array<i32>} : memref<8x1xf32, #tpu.memory_space<vmem>>, vector<8x1xf32>,
    %c0_24 = arith.constant 0 : index
    %c0_25 = arith.constant 0 : index
    %51 = vector.load %arg8[%c0_24, %c0_25] : memref<8x1xf32, #tpu.memory_space<vmem>>, vector<8x1xf32>
    tpu.vector_store %arg8[%c0_24, %c0_25], %39 {strides = array<i32>} : memref<8x1xf32, #tpu.memory_space<vmem>>, vector<8x1xf32>,
    %c128_i32_26 = arith.constant 128 : i32
    %52 = arith.addi %1, %c128_i32_26 : i32
    %53 = arith.cmpi slt, %0, %52 : i32
    %c8_i32_27 = arith.constant 8 : i32
    %54 = arith.addi %0, %c8_i32_27 : i32
    %55 = arith.cmpi slt, %1, %54 : i32
    %56 = arith.andi %53, %55 : i1
    %57 = arith.extui %56 : i1 to i32
    %c0_i32_28 = arith.constant 0 : i32
    %58 = arith.cmpi ne, %57, %c0_i32_28 : i32
    scf.if %58 {
      %62 = tpu.iota {dimensions = array<i32: 1>} : vector<8x128xi32>
      %63 = tpu.iota {dimensions = array<i32: 0>} : vector<8x128xi32>
      %64 = arith.subi %62, %63 : vector<8x128xi32>
      %65 = arith.subi %0, %1 : i32
      %66 = vector.broadcast %65 : i32 to vector<8x128xi32>
      %67 = arith.cmpi eq, %64, %66 : vector<8x128xi32>
      %c0_31 = arith.constant 0 : index
      %c0_32 = arith.constant 0 : index
      %68 = vector.load %arg7[%c0_31, %c0_32] : memref<8x1xf32, #tpu.memory_space<vmem>>, vector<8x1xf32>
      %cst_33 = arith.constant 0.000000e+00 : f32
      %69 = vector.broadcast %cst_33 : f32 to vector<8x128xf32>
      %70 = arith.select %67, %15, %69 : vector<8x128xi1>, vector<8x128xf32>
      %cst_34 = arith.constant dense<0.000000e+00> : vector<8xf32>
      %71 = vector.multi_reduction <add>, %70, %cst_34 [1] : vector<8x128xf32> to vector<8xf32>
      %72 = vector.shape_cast %71 : vector<8xf32> to vector<8x1xf32>
      %73 = arith.addf %68, %72 : vector<8x1xf32>
      %c0_35 = arith.constant 0 : index
      %c0_36 = arith.constant 0 : index
      %74 = vector.load %arg7[%c0_35, %c0_36] : memref<8x1xf32, #tpu.memory_space<vmem>>, vector<8x1xf32>
      tpu.vector_store %arg7[%c0_35, %c0_36], %73 {strides = array<i32>} : memref<8x1xf32, #tpu.memory_space<vmem>>, vector<8x1xf32>,
      %c0_37 = arith.constant 0 : index
      %c0_38 = arith.constant 0 : index
      %75 = vector.load %arg10[%c0_37, %c0_38] : memref<8x1xf32, #tpu.memory_space<vmem>>, vector<8x1xf32>
      %cst_39 = arith.constant 0.000000e+00 : f32
      %76 = vector.broadcast %cst_39 : f32 to vector<8x128xf32>
      %77 = arith.select %67, %19, %76 : vector<8x128xi1>, vector<8x128xf32>
      %cst_40 = arith.constant dense<0.000000e+00> : vector<8xf32>
      %78 = vector.multi_reduction <add>, %77, %cst_40 [1] : vector<8x128xf32> to vector<8xf32>
      %79 = vector.shape_cast %78 : vector<8xf32> to vector<8x1xf32>
      %80 = arith.addf %75, %79 : vector<8x1xf32>
      %c0_41 = arith.constant 0 : index
      %c0_42 = arith.constant 0 : index
      %81 = vector.load %arg10[%c0_41, %c0_42] : memref<8x1xf32, #tpu.memory_space<vmem>>, vector<8x1xf32>
      tpu.vector_store %arg10[%c0_41, %c0_42], %80 {strides = array<i32>} : memref<8x1xf32, #tpu.memory_space<vmem>>, vector<8x1xf32>,
    } else {
    }
    %c0_i32_29 = arith.constant 0 : i32
    %59 = arith.cmpi eq, %arg1, %c0_i32_29 : i32
    %60 = arith.extui %59 : i1 to i32
    %c0_i32_30 = arith.constant 0 : i32
    %61 = arith.cmpi ne, %60, %c0_i32_30 : i32
    scf.if %61 {
      %c0_31 = arith.constant 0 : index
      %c0_32 = arith.constant 0 : index
      %62 = vector.load %arg5[%c0_31, %c0_32] : memref<8x1xf32, #tpu.memory_space<vmem>>, vector<8x1xf32>
      %c0_33 = arith.constant 0 : index
      %c0_34 = arith.constant 0 : index
      %63 = vector.load %arg6[%c0_33, %c0_34] : memref<8x1xf32, #tpu.memory_space<vmem>>, vector<8x1xf32>
      %64 = math.log %63 : vector<8x1xf32>
      %65 = arith.addf %62, %64 : vector<8x1xf32>
      %c0_35 = arith.constant 0 : index
      %c0_36 = arith.constant 0 : index
      %66 = vector.load %arg8[%c0_35, %c0_36] : memref<8x1xf32, #tpu.memory_space<vmem>>, vector<8x1xf32>
      %c0_37 = arith.constant 0 : index
      %c0_38 = arith.constant 0 : index
      %67 = vector.load %arg9[%c0_37, %c0_38] : memref<8x1xf32, #tpu.memory_space<vmem>>, vector<8x1xf32>
      %68 = math.log %67 : vector<8x1xf32>
      %69 = arith.addf %66, %68 : vector<8x1xf32>
      %c0_39 = arith.constant 0 : index
      %c0_40 = arith.constant 0 : index
      %70 = vector.load %arg7[%c0_39, %c0_40] : memref<8x1xf32, #tpu.memory_space<vmem>>, vector<8x1xf32>
      %71 = arith.subf %65, %70 : vector<8x1xf32>
      %c0_41 = arith.constant 0 : index
      %c0_42 = arith.constant 0 : index
      %72 = vector.load %arg10[%c0_41, %c0_42] : memref<8x1xf32, #tpu.memory_space<vmem>>, vector<8x1xf32>
      %73 = arith.subf %69, %72 : vector<8x1xf32>
      %74 = arith.addf %71, %73 : vector<8x1xf32>
      %75 = tpu.iota {dimensions = array<i32: 0>} : vector<8x1xi32>
      %76 = vector.broadcast %0 : i32 to vector<8x1xi32>
      %77 = arith.addi %76, %75 : vector<8x1xi32>
      %c8_i32_43 = arith.constant 8 : i32
      %78 = vector.broadcast %c8_i32_43 : i32 to vector<8x1xi32>
      %79 = arith.cmpi slt, %77, %78 : vector<8x1xi32>
      %cst_44 = arith.constant 0.000000e+00 : f32
      %80 = vector.broadcast %cst_44 : f32 to vector<8x1xf32>
      %81 = arith.select %79, %74, %80 : vector<8x1xi1>, vector<8x1xf32>
      %c0_45 = arith.constant 0 : index
      %c0_46 = arith.constant 0 : index
      %82 = vector.load %arg4[%c0_45, %c0_46] : memref<8x1xf32, #tpu.memory_space<vmem>>, vector<8x1xf32>
      tpu.vector_store %arg4[%c0_45, %c0_46], %81 {strides = array<i32>} : memref<8x1xf32, #tpu.memory_space<vmem>>, vector<8x1xf32>,
    } else {
    }
    return
  }
  func.func @transform_0(%arg0: i32, %arg1: i32) -> (i32, i32) {
    %c0_i32 = arith.constant 0 : i32
    return %arg0, %arg1 : i32, i32
  }
  func.func @transform_1(%arg0: i32, %arg1: i32) -> (i32, i32) {
    %c0_i32 = arith.constant 0 : i32
    return %arg0, %arg1 : i32, i32
  }
  func.func @transform_2(%arg0: i32, %arg1: i32) -> (i32, i32) {
    %c0_i32 = arith.constant 0 : i32
    %c0_i32_0 = arith.constant 0 : i32
    return %arg0, %c0_i32 : i32, i32
  }
}

</mosaic_0001>

<llo_original>
// kernel: tpu_custom_call.1
$region0: #{tpu_custom_call.1}
  #allocation0 [shape = 'u32[]', space=smem, size = 0x4, offset = 0x4, fixed_abs, tag = 'smem constant byte address 0x4 - core index']
  #allocation1 [shape = 'u32[72,128]{1,0:T(1,128)}', space=vmem, size = 0x9000, scoped, tag = 'internal scratch']
  #allocation2 [shape = 'f32[8,1]{1,0:T(8,128)}', space=vmem, size = 0x1000, scoped, tag = 'scratch operand']
  #allocation3 [shape = 'f32[8,1]{1,0:T(8,128)}', space=vmem, size = 0x1000, scoped, tag = 'scratch operand']
  #allocation4 [shape = 'f32[8,1]{1,0:T(8,128)}', space=vmem, size = 0x1000, scoped, tag = 'scratch operand']
  #allocation5 [shape = 'f32[8,1]{1,0:T(8,128)}', space=vmem, size = 0x1000, scoped, tag = 'scratch operand']
  #allocation6 [shape = 'f32[8,1]{1,0:T(8,128)}', space=vmem, size = 0x1000, scoped, tag = 'scratch operand']
  #allocation7 [shape = 'f32[8,1]{1,0:T(8,128)}', space=vmem, size = 0x1000, scoped, tag = 'scratch operand']
  %s0 = inlined_call_operand.hbm [shape: f32[8,8], index: 0, kind: input, shape index: {}]
  %s1 = inlined_call_operand.hbm [shape: f32[8,8], index: 1, kind: input, shape index: {}]
  %s2 = inlined_call_operand.vmem [shape: f32[8,1], index: 2, kind: output, shape index: {}]
  %s3 = sld [smem:[#allocation0]]
  $region38: #{tpu_custom_call.1} parent=0
    _
  %s5 = ssub.s32 1, %s3
  %s6 = scalar_select 0, %s5, %s3
  $region1: #{tpu_custom_call.1} parent=0
    #allocation8 [shape = 'u8[4096]{0}', space=vmem, size = 0x1000, scoped, tag = 'input window, operand 0, single buffered']
    #allocation9 [shape = 's32[1]{0}', space=sflag, size = 0x4, scoped, tag = 'scoped memory for tpu_custom_call.1']
    #allocation10 [shape = 'u8[4096]{0}', space=vmem, size = 0x1000, scoped, tag = 'input window, operand 1, single buffered']
    #allocation11 [shape = 's32[1]{0}', space=sflag, size = 0x4, scoped, tag = 'scoped memory for tpu_custom_call.1']
    %7 = vsyncpa [#allocation9], 0
    %8 = vsyncpa [#allocation11], 0
    // Predicated region
    $region2: #{tpu_custom_call.1} parent=1 // pred_check
      _
    $region3: #{tpu_custom_call.1} parent=1 // pred_check_branch
      %10 = sbr.rel (0) target = $region5
    $region4: #{tpu_custom_call.1} parent=1 // pred_region
      %12 = vsyncadd [#allocation9], 0
      %s14 = sshll.u32 %s0, 4
      %s15 = int_to_ptr.hbm [resolvable:$true] %s14
      %s16 = sshll.u32 [#allocation8], 4
      %s17 = int_to_ptr.vmem [resolvable:$true] %s16
      %19 = dma.hbm_to_vmem [thread:$0]  %s15, 128, %s17, [#allocation9]
    $region5: #{tpu_custom_call.1} parent=1 // pred_fallthru
      _
    // Predicated region
    $region6: #{tpu_custom_call.1} parent=1 // pred_check
      _
    $region7: #{tpu_custom_call.1} parent=1 // pred_check_branch
      %21 = sbr.rel (0) target = $region9
    $region8: #{tpu_custom_call.1} parent=1 // pred_region
      %23 = vsyncadd [#allocation11], 0
      %s25 = sshll.u32 %s1, 4
      %s26 = int_to_ptr.hbm [resolvable:$true] %s25
      %s27 = sshll.u32 [#allocation10], 4
      %s28 = int_to_ptr.vmem [resolvable:$true] %s27
      %30 = dma.hbm_to_vmem [thread:$0]  %s26, 128, %s28, [#allocation11]
    $region9: #{tpu_custom_call.1} parent=1 // pred_fallthru
      _
    // Predicated region
    $region10: #{tpu_custom_call.1} parent=1 // pred_check
      _
    $region11: #{tpu_custom_call.1} parent=1 // pred_check_branch
      %32 = sbr.rel (0) target = $region13
    $region12: #{tpu_custom_call.1} parent=1 // pred_region
      %34 = dma.done [#allocation9], 128
    $region13: #{tpu_custom_call.1} parent=1 // pred_fallthru
      _
    // Predicated region
    $region14: #{tpu_custom_call.1} parent=1 // pred_check
      _
    $region15: #{tpu_custom_call.1} parent=1 // pred_check_branch
      %36 = sbr.rel (0) target = $region17
    $region16: #{tpu_custom_call.1} parent=1 // pred_region
      %38 = dma.done [#allocation11], 128
    $region17: #{tpu_custom_call.1} parent=1 // pred_fallthru
      _
    %s39 = smul.u32 0, 8
    %s40 = smul.u32 0, 128
    %p41 = scmp.eq.s32.totalorder 0, 0
    // Predicated region
    $region18: #{tpu_custom_call.1} parent=1 // pred_check
      %p42 = pneg %p41
    $region19: #{tpu_custom_call.1} parent=1 // pred_check_branch
      %44 = sbr.rel (%p42) target = $region21
    $region20: #{tpu_custom_call.1} parent=1 // pred_region
      %vm45 = vcmask 7168
      %46 = vst.msk [vmem:[#allocation2] sm:$0xff] %vm45, -inf
      %47 = vst.msk [vmem:[#allocation5] sm:$0xff] %vm45, -inf
      %48 = vst.msk [vmem:[#allocation3] sm:$0xff] %vm45, 0.0
      %49 = vst.msk [vmem:[#allocation6] sm:$0xff] %vm45, 0.0
      %50 = vst.msk [vmem:[#allocation4] sm:$0xff] %vm45, 0.0
      %51 = vst.msk [vmem:[#allocation7] sm:$0xff] %vm45, 0.0
    $region21: #{tpu_custom_call.1} parent=1 // pred_fallthru
      _
    %v52 = vld [vmem:[#allocation8] sm:$0xff]
    %v53 = vld [vmem:[#allocation10] sm:$0xff]
    %v54 = vlaneseq
    %v55 = vand.u32 %v54, 127
    %v56 = vstv %s40
    %v57 = vadd.s32 %v56, %v55
    %vm58 = vcmp.lt.s32.totalorder %v57, 8
    %v59 = vsel %vm58, 1, 0
    %vm60 = vcmp.eq.s32.totalorder %v59, 1
    %v61 = vsel %vm60, %v52, -1e+30
    %v62 = vsel %vm60, %v53, -1e+30
    %v63 = vld [vmem:[#allocation2] sm:$0xff]
    %64 = vmax.xlane.f32.xlu0 %v61
    %v65 = vpop.xlane.xlu0 %64
    %v66 = vmax.f32 %v63, %v65
    %v67 = vsub.f32 %v63, %v66
    %v68 = vmul.f32 %v67, 1.442695
    %v69 = vpow.pop %v68
    %71 = vset.pattern.permute.xlu0 0
    %72 = vperm.xlu0 %71, %v66
    %v73 = vpop.permute.xlu0 %72
    %v75 = vsub.f32 %v61, %v73
    %v76 = vmul.f32 %v75, 1.442695
    %v77 = vpow.pop %v76
    %v78 = vld [vmem:[#allocation3] sm:$0xff]
    %v79 = vmul.f32 %v69, %v78
    %80 = vadd.xlane.f32.xlu0 %v77
    %v81 = vpop.xlane.xlu0 %80
    %v82 = vadd.f32 %v79, %v81
    %vm83 = vcmask 7168
    %84 = vst.msk [vmem:[#allocation3] sm:$0xff] %vm83, %v82
    %85 = vst.msk [vmem:[#allocation2] sm:$0xff] %vm83, %v66
    %v86 = vld [vmem:[#allocation5] sm:$0xff]
    %87 = vmax.xlane.f32.xlu0 %v62
    %v88 = vpop.xlane.xlu0 %87
    %v89 = vmax.f32 %v86, %v88
    %v90 = vsub.f32 %v86, %v89
    %v91 = vmul.f32 %v90, 1.442695
    %v92 = vpow.pop %v91
    %94 = vset.pattern.permute.xlu0 0
    %95 = vperm.xlu0 %94, %v89
    %v96 = vpop.permute.xlu0 %95
    %v98 = vsub.f32 %v62, %v96
    %v99 = vmul.f32 %v98, 1.442695
    %v100 = vpow.pop %v99
    %v101 = vld [vmem:[#allocation6] sm:$0xff]
    %v102 = vmul.f32 %v92, %v101
    %103 = vadd.xlane.f32.xlu0 %v100
    %v104 = vpop.xlane.xlu0 %103
    %v105 = vadd.f32 %v102, %v104
    %106 = vst.msk [vmem:[#allocation6] sm:$0xff] %vm83, %v105
    %107 = vst.msk [vmem:[#allocation5] sm:$0xff] %vm83, %v89
    %s108 = sadd.s32 %s40, 128
    %p109 = scmp.lt.s32.totalorder %s39, %s108
    %s110 = sadd.s32 %s39, 8
    %p111 = scmp.lt.s32.totalorder %s40, %s110
    %p112 = pnand %p109, %p111
    %p113 = pneg %p112
    // Predicated region
    $region22: #{tpu_custom_call.1} parent=1 // pred_check
      _
    $region23: #{tpu_custom_call.1} parent=1 // pred_check_branch
      %115 = sbr.rel (%p112) target = $region25
    $region24: #{tpu_custom_call.1} parent=1 // pred_region
      %v116 = vlaneseq
      %v117 = vshrl.u32 %v116, 7
      %v118 = vsub.s32 %v55, %v117
      %s119 = ssub.s32 %s39, %s40
      %v120 = vstv %s119
      %vm121 = vcmp.eq.s32.totalorder %v118, %v120
      %v122 = vld [vmem:[#allocation4] sm:$0xff]
      %v123 = vsel %vm121, %v61, 0.0
      %124 = vadd.xlane.f32.xlu0 %v123
      %v125 = vpop.xlane.xlu0 %124
      %v126 = vadd.f32 %v122, %v125
      %127 = vst.msk [vmem:[#allocation4] sm:$0xff] %vm83, %v126
      %v128 = vld [vmem:[#allocation7] sm:$0xff]
      %v129 = vsel %vm121, %v62, 0.0
      %130 = vadd.xlane.f32.xlu0 %v129
      %v131 = vpop.xlane.xlu0 %130
      %v132 = vadd.f32 %v128, %v131
      %133 = vst.msk [vmem:[#allocation7] sm:$0xff] %vm83, %v132
    $region25: #{tpu_custom_call.1} parent=1 // pred_fallthru
      _
    // Predicated region
    $region26: #{tpu_custom_call.1} parent=1 // pred_check
      %p134 = pneg %p41
    $region27: #{tpu_custom_call.1} parent=1 // pred_check_branch
      %136 = sbr.rel (%p134) target = $region29
    $region28: #{tpu_custom_call.1} parent=1 // pred_region
      %v137 = vld [vmem:[#allocation2] sm:$0xff]
      %v138 = vld [vmem:[#allocation3] sm:$0xff]
      %v139 = vlog2.pop %v138
      %v140 = vmul.f32 %v139, 0.6931472
      %v141 = vadd.f32 %v137, %v140
      %v142 = vld [vmem:[#allocation5] sm:$0xff]
      %v143 = vld [vmem:[#allocation6] sm:$0xff]
      %v144 = vlog2.pop %v143
      %v145 = vmul.f32 %v144, 0.6931472
      %v146 = vadd.f32 %v142, %v145
      %v147 = vld [vmem:[#allocation4] sm:$0xff]
      %v148 = vsub.f32 %v141, %v147
      %v149 = vld [vmem:[#allocation7] sm:$0xff]
      %v150 = vsub.f32 %v146, %v149
      %v151 = vadd.f32 %v148, %v150
      %v152 = vlaneseq
      %v153 = vshrl.u32 %v152, 7
      %v154 = vstv %s39
      %v155 = vadd.s32 %v154, %v153
      %vm156 = vcmp.lt.s32.totalorder %v155, 8
      %v157 = vsel %vm156, %v151, 0.0
      %158 = vst.msk [vmem:[%s2] sm:$0xff] %vm83, %v157
    $region29: #{tpu_custom_call.1} parent=1 // pred_fallthru
      _
    // Predicated region
    $region30: #{tpu_custom_call.1} parent=1 // pred_check
      _
    $region31: #{tpu_custom_call.1} parent=1 // pred_check_branch
      %160 = sbr.rel (0) target = $region33
    $region32: #{tpu_custom_call.1} parent=1 // pred_region
      _
    $region33: #{tpu_custom_call.1} parent=1 // pred_fallthru
      _
    // Predicated region
    $region34: #{tpu_custom_call.1} parent=1 // pred_check
      _
    $region35: #{tpu_custom_call.1} parent=1 // pred_check_branch
      %162 = sbr.rel (0) target = $region37
    $region36: #{tpu_custom_call.1} parent=1 // pred_region
      _
    $region37: #{tpu_custom_call.1} parent=1 // pred_fallthru
      _
    %163 = vsyncpa [#allocation9], 1
    %164 = vsyncpa [#allocation11], 1

</llo_original>
